<compile_context>
chip_gen: v7x
topology: tpu7x:2x2x1
jax: 0.10.0
libtpu: 0.0.40
codegen_flags: <defaults>
</compile_context>

<pallas_src>
import numpy as np
import jax
import jax.numpy as jnp
from jax.experimental import pallas as pl
from jax.experimental.pallas import tpu as pltpu

LANE = 128


def _round_up(x: int, m: int) -> int:
    return (x + m - 1) // m * m


# ---------------------------------------------------------------------------
# Kernel 1: per-node-tile feature fake-quant fused with h = x_q @ W_q^T.
# W is pre-fake-quantized, transposed to [F_in_p, F_out_p], zero-padded, bf16.
# Quant params arrive packed as (tile, 4) = [scale, inv_scale, zp, qmax].
# Output h is bf16 and lane-dense (F_out padded to 128).
# ---------------------------------------------------------------------------
def _quant_linear_kernel(x_ref, qp_ref, w_ref, h_ref):
    x = x_ref[...]                                   # (TN, F_in_p) f32
    qp = qp_ref[...]                                 # (TN, 4) f32
    scale = qp[:, 0:1]
    inv_scale = qp[:, 1:2]
    zp = qp[:, 2:3]
    qmax = qp[:, 3:4]
    # Fake-quant in f32 on the VPU.
    x_q = jnp.clip(jnp.round((x - zp) * inv_scale), 0.0, qmax) * scale + zp
    # bf16 operands -> single-pass full-rate MXU, f32 accumulation.
    h = jnp.dot(x_q.astype(jnp.bfloat16), w_ref[...],
                preferred_element_type=jnp.float32)
    h_ref[...] = h.astype(h_ref.dtype)


# ---------------------------------------------------------------------------
# Kernel 2: out = A_norm @ h + bias, tiled over (row tile i, reduction tile k).
# A and h are bf16; accumulation happens directly in the resident f32 output
# block (its BlockSpec returns (i, 0) for every k) — no scratch accumulator.
# ---------------------------------------------------------------------------
def _propagate_kernel(a_ref, h_ref, b_ref, o_ref):
    k = pl.program_id(1)
    prod = jnp.dot(a_ref[...], h_ref[...], preferred_element_type=jnp.float32)

    @pl.when(k == 0)
    def _():
        o_ref[...] = prod

    @pl.when(k != 0)
    def _():
        o_ref[...] = o_ref[...] + prod

    @pl.when(k == pl.num_programs(1) - 1)
    def _():
        o_ref[...] = o_ref[...] + b_ref[...]


# ---------------------------------------------------------------------------
# Host-side helpers (glue)
# ---------------------------------------------------------------------------
def fake_quant_per_tensor(w, num_bits: int):
    """Per-tensor fake-quant (STEQuantFn forward), with degenerate-range guard."""
    qmax = float(2 ** num_bits - 1)
    w_min = jnp.min(w)
    rng = jnp.max(w) - w_min
    scale = jnp.where(rng > 0, rng / qmax, 1.0)
    inv = jnp.where(rng > 0, qmax / rng, 0.0)
    return jnp.clip(jnp.round((w - w_min) * inv), 0.0, qmax) * scale + w_min


def build_normalized_adjacency(edge_index: np.ndarray, num_nodes: int) -> np.ndarray:
    """Dense D^{-1/2}(A+I)D^{-1/2}, matching PyG gcn_norm (source -> target)."""
    src, dst = edge_index[0], edge_index[1]
    a_hat = np.zeros((num_nodes, num_nodes), dtype=np.float32)
    a_hat[dst, src] = 1.0
    a_hat[np.arange(num_nodes), np.arange(num_nodes)] = 1.0
    deg = a_hat.sum(axis=1)
    d_inv_sqrt = 1.0 / np.sqrt(deg)
    return (d_inv_sqrt[:, None] * a_hat * d_inv_sqrt[None, :]).astype(np.float32)


def per_node_quant_params(x: np.ndarray, bit_assign: np.ndarray) -> np.ndarray:
    """Packed per-node (scale, inv_scale, zp, qmax) from per-group min/max.

    Groups = unique values in bit_assign; inv_scale precomputed on host so the
    kernel has no f32 divides.  Degenerate (all-equal) groups get inv=0 so
    x_q == zp == x (no NaN).
    """
    n = x.shape[0]
    qp = np.zeros((n, 4), np.float32)                # [scale, inv, zp, qmax]
    qp[:, 0] = 1.0
    for bit_val in np.unique(bit_assign):
        mask = bit_assign == bit_val
        if not mask.any():
            continue
        sel = x[mask]
        mn, mx = float(sel.min()), float(sel.max())
        q = float(2 ** int(bit_val) - 1)
        rng = mx - mn
        qp[mask, 2] = mn
        qp[mask, 3] = q
        if rng > 0.0:
            qp[mask, 0] = rng / q
            qp[mask, 1] = q / rng
        else:
            qp[mask, 0] = 1.0
            qp[mask, 1] = 0.0
    return qp


# ---------------------------------------------------------------------------
# Wrapper
# ---------------------------------------------------------------------------
def quant_gcn_conv(a_norm, x, x_qparams, weight, bias, *, weight_bit: int):
    n, f_in = x.shape
    f_out = weight.shape[0]

    # Hoisted per-tensor weight fake-quant (constant w.r.t. x; never per-tile).
    w_q = fake_quant_per_tensor(weight.astype(jnp.float32), weight_bit)

    # Lane-dense padding of feature / output axes; node axis rounded to tiles.
    f_in_p = _round_up(f_in, LANE)
    f_out_p = _round_up(f_out, LANE)
    if n <= 512:
        tile = _round_up(n, LANE)          # tiny problems: single row tile
        n_pad = tile
    else:
        tile = 512
        n_pad = _round_up(n, tile)

    # Stage-2 reduction tile: keep h VMEM-resident when it (plus the
    # double-buffered A row-slab) fits comfortably; otherwise stream with a
    # large k tile to amortize the ~0.35 us per-grid-step overhead.
    h_bytes = n_pad * f_out_p * 2                    # bf16 h
    a_slab_bytes = 2 * tile * n_pad * 2              # double-buffered bf16 A row slab
    if h_bytes + a_slab_bytes <= 20 * 1024 * 1024:
        tk = n_pad                                   # resident h, single k step
    else:
        tk = 2048
        n_pad = _round_up(n, tk)                     # tile(512) divides tk(2048)

    n_row_tiles = n_pad // tile
    n_k_tiles = n_pad // tk

    # ---- padded operands -------------------------------------------------
    xp = jnp.zeros((n_pad, f_in_p), jnp.float32).at[:n, :f_in].set(
        x.astype(jnp.float32))
    qp = jnp.zeros((n_pad, 4), jnp.float32).at[:n].set(x_qparams)
    # Weight pre-transposed to [F_in_p, F_out_p], bf16: straight K-major MXU push.
    wt = jnp.zeros((f_in_p, f_out_p), jnp.bfloat16).at[:f_in, :f_out].set(
        w_q.T.astype(jnp.bfloat16))
    # bf16 adjacency built directly padded (no padded f32 N x N intermediate).
    ap = jnp.zeros((n_pad, n_pad), jnp.bfloat16).at[:n, :n].set(
        a_norm.astype(jnp.bfloat16))
    bp = jnp.zeros((1, f_out_p), jnp.float32).at[0, :f_out].set(
        bias.astype(jnp.float32))

    # --- stage 1: h = fakequant(x) @ W_q^T, per node tile, bf16 lane-dense ---
    h = pl.pallas_call(
        _quant_linear_kernel,
        out_shape=jax.ShapeDtypeStruct((n_pad, f_out_p), jnp.bfloat16),
        grid_spec=pltpu.PrefetchScalarGridSpec(
            num_scalar_prefetch=0,
            grid=(n_row_tiles,),
            in_specs=[
                pl.BlockSpec((tile, f_in_p), lambda i: (i, 0)),
                pl.BlockSpec((tile, 4), lambda i: (i, 0)),
                pl.BlockSpec((f_in_p, f_out_p), lambda i: (0, 0)),
            ],
            out_specs=pl.BlockSpec((tile, f_out_p), lambda i: (i, 0)),
        ),
        compiler_params=pltpu.CompilerParams(
            dimension_semantics=("parallel",),
            vmem_limit_bytes=32 * 1024 * 1024),
        cost_estimate=pl.CostEstimate(
            flops=2 * n_pad * f_in_p * f_out_p,
            transcendentals=0,
            bytes_accessed=4 * n_pad * f_in_p + 2 * f_in_p * f_out_p
                           + 2 * n_pad * f_out_p),
    )(xp, qp, wt)

    # --- stage 2: out = A @ h + bias, (i, k) grid, accumulate in o_ref -------
    if n_k_tiles >= 4:
        # Streamed A on a long reduction: deepen the pipeline (v7x latency hiding).
        a_spec = pl.BlockSpec((tile, tk), lambda i, k: (i, k),
                              pipeline_mode=pl.Buffered(3))
    else:
        a_spec = pl.BlockSpec((tile, tk), lambda i, k: (i, k))

    out = pl.pallas_call(
        _propagate_kernel,
        out_shape=jax.ShapeDtypeStruct((n_pad, f_out_p), jnp.float32),
        grid_spec=pltpu.PrefetchScalarGridSpec(
            num_scalar_prefetch=0,
            grid=(n_row_tiles, n_k_tiles),
            in_specs=[
                a_spec,
                # When tk == n_pad the block index is constant -> h fetched once
                # and kept VMEM-resident; otherwise streamed per k tile.
                pl.BlockSpec((tk, f_out_p), lambda i, k: (k, 0)),
                pl.BlockSpec((1, f_out_p), lambda i, k: (0, 0)),
            ],
            out_specs=pl.BlockSpec((tile, f_out_p), lambda i, k: (i, 0)),
        ),
        compiler_params=pltpu.CompilerParams(
            dimension_semantics=("parallel", "arbitrary"),
            vmem_limit_bytes=32 * 1024 * 1024),
        cost_estimate=pl.CostEstimate(
            flops=2 * n_pad * n_pad * f_out_p,
            transcendentals=0,
            bytes_accessed=2 * n_pad * n_pad + 2 * n_pad * f_out_p
                           + 4 * n_pad * f_out_p),
    )(ap, h, bp)

    return out[:n, :f_out]


# ---------------------------------------------------------------------------
if __name__ == "__main__":
    # Small, deterministic problem: 16 nodes, 8 input feats, 16 output feats.
    N, F_IN, F_OUT = 16, 8, 16
    WEIGHT_BIT = 4

    key = jax.random.PRNGKey(0)
    k_x, k_w = jax.random.split(key)

    x = np.asarray(jax.random.normal(k_x, (N, F_IN), dtype=jnp.float32))

    # Ring graph, undirected: edge_index [2, E].
    src = np.concatenate([np.arange(N), (np.arange(N) + 1) % N])
    dst = np.concatenate([(np.arange(N) + 1) % N, np.arange(N)])
    edge_index = np.stack([src, dst]).astype(np.int32)

    # Deterministic per-node bit assignment (the module's registered buffer).
    bit_assign = np.array([1, 2, 4, 8] * (N // 4), dtype=np.int32)

    # GCNConv parameters: lin.weight [F_out, F_in], zero-init bias (PyG default).
    limit = float(np.sqrt(6.0 / (F_IN + F_OUT)))
    weight = np.asarray(
        jax.random.uniform(k_w, (F_OUT, F_IN), minval=-limit, maxval=limit,
                           dtype=jnp.float32))
    bias = np.zeros((F_OUT,), dtype=np.float32)

    # Glue: dense normalized adjacency + packed per-node quant params.
    a_norm = build_normalized_adjacency(edge_index, N)
    x_qparams = per_node_quant_params(x, bit_assign)

    out = quant_gcn_conv(
        jnp.asarray(a_norm), jnp.asarray(x), jnp.asarray(x_qparams),
        jnp.asarray(weight), jnp.asarray(bias),
        weight_bit=WEIGHT_BIT)
    out = np.asarray(jax.block_until_ready(out))

    # --- references ---------------------------------------------------------
    def bf16_round(v):
        return np.asarray(jnp.asarray(v).astype(jnp.bfloat16).astype(jnp.float32))

    scale = x_qparams[:, 0:1]
    inv_scale = x_qparams[:, 1:2]
    zp = x_qparams[:, 2:3]
    qmax = x_qparams[:, 3:4]
    x_q_ref = (np.clip(np.round((x - zp) * inv_scale), 0.0, qmax)
               * scale + zp)
    w_q_ref = np.asarray(fake_quant_per_tensor(jnp.asarray(weight), WEIGHT_BIT))

    # Reference mirroring the kernel's bf16 operand stream (f32 accumulate).
    h_bf = bf16_round(bf16_round(x_q_ref) @ bf16_round(w_q_ref).T)
    ref_bf = bf16_round(a_norm) @ h_bf + bias[None, :]
    np.testing.assert_allclose(out, ref_bf, rtol=1e-2, atol=1e-2)

    # Full-f32 module semantics (bf16 stream introduces only small rounding).
    ref_f32 = a_norm @ (x_q_ref @ w_q_ref.T) + bias[None, :]
    np.testing.assert_allclose(out, ref_f32, rtol=5e-2, atol=5e-2)

    print("KERNEL_OK")
</pallas_src>

<mosaic_0001>
module attributes {stable_mosaic.version = 11 : i64} {
  func.func @_quant_linear_kernel(%arg0: i32, %arg1: memref<128x128xf32, #tpu.memory_space<vmem>>, %arg2: memref<128x4xf32, #tpu.memory_space<vmem>>, %arg3: memref<128x128xbf16, #tpu.memory_space<vmem>>, %arg4: memref<128x128xbf16, #tpu.memory_space<vmem>>) attributes {dimension_semantics = [#tpu.dimension_semantics<parallel>], iteration_bounds = array<i64: 1>, scalar_prefetch = 0 : i64, scratch_operands = 0 : i64, tpu.core_type = #tpu.core_type<tc>, window_params = [{transform_indices = @transform_0, window_bounds = array<i64: 128, 128>}, {transform_indices = @transform_1, window_bounds = array<i64: 128, 4>}, {pipeline_mode = #tpu.pipeline_mode<synchronous>, transform_indices = @transform_2, window_bounds = array<i64: 128, 128>}, {transform_indices = @transform_3, window_bounds = array<i64: 128, 128>}]} {
    %c0 = arith.constant 0 : index
    %c0_0 = arith.constant 0 : index
    %0 = vector.load %arg1[%c0, %c0_0] : memref<128x128xf32, #tpu.memory_space<vmem>>, vector<128x128xf32>
    %c0_1 = arith.constant 0 : index
    %c0_2 = arith.constant 0 : index
    %1 = vector.load %arg2[%c0_1, %c0_2] : memref<128x4xf32, #tpu.memory_space<vmem>>, vector<128x4xf32>
    %2 = vector.extract_strided_slice %1 {offsets = [0, 0], sizes = [128, 1], strides = [1, 1]} : vector<128x4xf32> to vector<128x1xf32>
    %3 = vector.extract_strided_slice %1 {offsets = [0, 1], sizes = [128, 1], strides = [1, 1]} : vector<128x4xf32> to vector<128x1xf32>
    %4 = vector.extract_strided_slice %1 {offsets = [0, 2], sizes = [128, 1], strides = [1, 1]} : vector<128x4xf32> to vector<128x1xf32>
    %5 = vector.extract_strided_slice %1 {offsets = [0, 3], sizes = [128, 1], strides = [1, 1]} : vector<128x4xf32> to vector<128x1xf32>
    %6 = vector.broadcast %4 : vector<128x1xf32> to vector<128x128xf32>
    %7 = arith.subf %0, %6 : vector<128x128xf32>
    %8 = vector.broadcast %3 : vector<128x1xf32> to vector<128x128xf32>
    %9 = arith.mulf %7, %8 : vector<128x128xf32>
    %10 = math.roundeven %9 : vector<128x128xf32>
    %cst = arith.constant 0.000000e+00 : f32
    %11 = vector.broadcast %cst : f32 to vector<128x128xf32>
    %12 = arith.maximumf %11, %10 : vector<128x128xf32>
    %13 = vector.broadcast %5 : vector<128x1xf32> to vector<128x128xf32>
    %14 = arith.minimumf %13, %12 : vector<128x128xf32>
    %15 = vector.broadcast %2 : vector<128x1xf32> to vector<128x128xf32>
    %16 = arith.mulf %14, %15 : vector<128x128xf32>
    %17 = vector.broadcast %4 : vector<128x1xf32> to vector<128x128xf32>
    %18 = arith.addf %16, %17 : vector<128x128xf32>
    %19 = arith.truncf %18 : vector<128x128xf32> to vector<128x128xbf16>
    %c0_3 = arith.constant 0 : index
    %c0_4 = arith.constant 0 : index
    %20 = vector.load %arg3[%c0_3, %c0_4] : memref<128x128xbf16, #tpu.memory_space<vmem>>, vector<128x128xbf16>
    %cst_5 = arith.constant dense<0.000000e+00> : vector<128x128xf32>
    %21 = tpu.matmul %19, %20, %cst_5 {dimension_numbers = #tpu.dot_dimension_numbers<[1], [0], [0], [1], [0, 0, 1, 1], [], []>} : vector<128x128xbf16>, vector<128x128xbf16>, vector<128x128xf32> -> vector<128x128xf32>
    %22 = arith.truncf %21 : vector<128x128xf32> to vector<128x128xbf16>
    %c0_6 = arith.constant 0 : index
    %c0_7 = arith.constant 0 : index
    %23 = vector.load %arg4[%c0_6, %c0_7] : memref<128x128xbf16, #tpu.memory_space<vmem>>, vector<128x128xbf16>
    tpu.vector_store %arg4[%c0_6, %c0_7], %22 {strides = array<i32>} : memref<128x128xbf16, #tpu.memory_space<vmem>>, vector<128x128xbf16>,
    return
  }
  func.func @transform_0(%arg0: i32) -> (i32, i32) {
    %c0_i32 = arith.constant 0 : i32
    %c0_i32_0 = arith.constant 0 : i32
    return %arg0, %c0_i32 : i32, i32
  }
  func.func @transform_1(%arg0: i32) -> (i32, i32) {
    %c0_i32 = arith.constant 0 : i32
    %c0_i32_0 = arith.constant 0 : i32
    return %arg0, %c0_i32 : i32, i32
  }
  func.func @transform_2(%arg0: i32) -> (i32, i32) {
    %c0_i32 = arith.constant 0 : i32
    %c0_i32_0 = arith.constant 0 : i32
    %c0_i32_1 = arith.constant 0 : i32
    return %c0_i32, %c0_i32_0 : i32, i32
  }
  func.func @transform_3(%arg0: i32) -> (i32, i32) {
    %c0_i32 = arith.constant 0 : i32
    %c0_i32_0 = arith.constant 0 : i32
    return %arg0, %c0_i32 : i32, i32
  }
}

</mosaic_0001>

<llo_original>
// kernel: tpu_custom_call.1
$region0: #{tpu_custom_call.1}
  #allocation0 [shape = 'u32[]', space=smem, size = 0x4, offset = 0x4, fixed_abs, tag = 'smem constant byte address 0x4 - core index']
  #allocation1 [shape = 'u32[144,128]{1,0:T(1,128)}', space=vmem, size = 0x12000, scoped, tag = 'internal scratch']
  %s0 = inlined_call_operand.vmem [shape: f32[128,128], index: 0, kind: input, shape index: {}]
  %s1 = inlined_call_operand.vmem [shape: f32[128,4], index: 1, kind: input, shape index: {}]
  %s2 = inlined_call_operand.hbm [shape: bf16[128,128], index: 2, kind: input, shape index: {}]
  %s3 = inlined_call_operand.hbm [shape: bf16[128,128], index: 3, kind: output, shape index: {}]
  %s4 = sld [smem:[#allocation0]]
  $region26: #{tpu_custom_call.1} parent=0
    _
  %s6 = ssub.s32 1, %s4
  %s7 = scalar_select 0, %s6, %s4
  $region1: #{tpu_custom_call.1} parent=0
    #allocation2 [shape = 'u8[32768]{0}', space=vmem, size = 0x8000, scoped, tag = 'input window, operand 2, single buffered']
    #allocation3 [shape = 's32[1]{0}', space=sflag, size = 0x4, scoped, tag = 'scoped memory for tpu_custom_call.1']
    #allocation4 [shape = 's32[1]{0}', space=sflag, size = 0x4, scoped, tag = 'scoped memory for tpu_custom_call.1']
    #allocation5 [shape = 'u8[32768]{0}', space=vmem, size = 0x8000, scoped, tag = 'output window, operand 0, single buffered']
    %8 = vsyncpa [#allocation3], 0
    %9 = vsyncpa [#allocation4], 0
    // Predicated region
    $region2: #{tpu_custom_call.1} parent=1 // pred_check
      _
    $region3: #{tpu_custom_call.1} parent=1 // pred_check_branch
      %11 = sbr.rel (0) target = $region5
    $region4: #{tpu_custom_call.1} parent=1 // pred_region
      _
    $region5: #{tpu_custom_call.1} parent=1 // pred_fallthru
      _
    // Predicated region
    $region6: #{tpu_custom_call.1} parent=1 // pred_check
      _
    $region7: #{tpu_custom_call.1} parent=1 // pred_check_branch
      %13 = sbr.rel (0) target = $region9
    $region8: #{tpu_custom_call.1} parent=1 // pred_region
      _
    $region9: #{tpu_custom_call.1} parent=1 // pred_fallthru
      _
    // Predicated region
    $region10: #{tpu_custom_call.1} parent=1 // pred_check
      _
    $region11: #{tpu_custom_call.1} parent=1 // pred_check_branch
      %15 = sbr.rel (0) target = $region13
    $region12: #{tpu_custom_call.1} parent=1 // pred_region
      %s17 = ssub.s32 1024, 1024
      %18 = vsyncadd [#allocation3], %s17
      %s19 = sshll.u32 [#allocation2], 4
      %s20 = int_to_ptr.vmem [resolvable:$true] %s19
      %25 = dma.hbm_to_vmem [thread:$0]  %s2, 1024, %s20, [#allocation3], 64, 64, 4
    $region13: #{tpu_custom_call.1} parent=1 // pred_fallthru
      _
    // Predicated region
    $region14: #{tpu_custom_call.1} parent=1 // pred_check
      _
    $region15: #{tpu_custom_call.1} parent=1 // pred_check_branch
      %27 = sbr.rel (0) target = $region17
    $region16: #{tpu_custom_call.1} parent=1 // pred_region
      %28 = dma.done [#allocation3], 1024
    $region17: #{tpu_custom_call.1} parent=1 // pred_fallthru
      _
    %v30 = vld [vmem:[%s0] sm:$0xff]
    %v31 = vld [vmem:[%s0 + $0x8] sm:$0xff]
    %v32 = vld [vmem:[%s0 + $0x10] sm:$0xff]
    %v33 = vld [vmem:[%s0 + $0x18] sm:$0xff]
    %v34 = vld [vmem:[%s0 + $0x20] sm:$0xff]
    %v35 = vld [vmem:[%s0 + $0x28] sm:$0xff]
    %v36 = vld [vmem:[%s0 + $0x30] sm:$0xff]
    %v37 = vld [vmem:[%s0 + $0x38] sm:$0xff]
    %v38 = vld [vmem:[%s0 + $0x40] sm:$0xff]
    %v39 = vld [vmem:[%s0 + $0x48] sm:$0xff]
    %v40 = vld [vmem:[%s0 + $0x50] sm:$0xff]
    %v41 = vld [vmem:[%s0 + $0x58] sm:$0xff]
    %v42 = vld [vmem:[%s0 + $0x60] sm:$0xff]
    %v43 = vld [vmem:[%s0 + $0x68] sm:$0xff]
    %v44 = vld [vmem:[%s0 + $0x70] sm:$0xff]
    %v45 = vld [vmem:[%s0 + $0x78] sm:$0xff]
    %v46 = vld [vmem:[%s1] sm:$0xff]
    %v47 = vld [vmem:[%s1 + $0x8] sm:$0xff]
    %v48 = vld [vmem:[%s1 + $0x10] sm:$0xff]
    %v49 = vld [vmem:[%s1 + $0x18] sm:$0xff]
    %v50 = vld [vmem:[%s1 + $0x20] sm:$0xff]
    %v51 = vld [vmem:[%s1 + $0x28] sm:$0xff]
    %v52 = vld [vmem:[%s1 + $0x30] sm:$0xff]
    %v53 = vld [vmem:[%s1 + $0x38] sm:$0xff]
    %v54 = vld [vmem:[%s1 + $0x40] sm:$0xff]
    %v55 = vld [vmem:[%s1 + $0x48] sm:$0xff]
    %v56 = vld [vmem:[%s1 + $0x50] sm:$0xff]
    %v57 = vld [vmem:[%s1 + $0x58] sm:$0xff]
    %v58 = vld [vmem:[%s1 + $0x60] sm:$0xff]
    %v59 = vld [vmem:[%s1 + $0x68] sm:$0xff]
    %v60 = vld [vmem:[%s1 + $0x70] sm:$0xff]
    %v61 = vld [vmem:[%s1 + $0x78] sm:$0xff]
    %63 = vset.pattern.permute.xlu0 2
    %64 = vperm.xlu0 %63, %v46
    %v65 = vpop.permute.xlu0 %64
    %68 = vset.pattern.permute.xlu0 2
    %69 = vperm.xlu0 %68, %v47
    %v70 = vpop.permute.xlu0 %69
    %73 = vset.pattern.permute.xlu0 2
    %74 = vperm.xlu0 %73, %v48
    %v75 = vpop.permute.xlu0 %74
    %78 = vset.pattern.permute.xlu0 2
    %79 = vperm.xlu0 %78, %v49
    %v80 = vpop.permute.xlu0 %79
    %83 = vset.pattern.permute.xlu0 2
    %84 = vperm.xlu0 %83, %v50
    %v85 = vpop.permute.xlu0 %84
    %88 = vset.pattern.permute.xlu0 2
    %89 = vperm.xlu0 %88, %v51
    %v90 = vpop.permute.xlu0 %89
    %93 = vset.pattern.permute.xlu0 2
    %94 = vperm.xlu0 %93, %v52
    %v95 = vpop.permute.xlu0 %94
    %98 = vset.pattern.permute.xlu0 2
    %99 = vperm.xlu0 %98, %v53
    %v100 = vpop.permute.xlu0 %99
    %103 = vset.pattern.permute.xlu0 2
    %104 = vperm.xlu0 %103, %v54
    %v105 = vpop.permute.xlu0 %104
    %108 = vset.pattern.permute.xlu0 2
    %109 = vperm.xlu0 %108, %v55
    %v110 = vpop.permute.xlu0 %109
    %113 = vset.pattern.permute.xlu0 2
    %114 = vperm.xlu0 %113, %v56
    %v115 = vpop.permute.xlu0 %114
    %118 = vset.pattern.permute.xlu0 2
    %119 = vperm.xlu0 %118, %v57
    %v120 = vpop.permute.xlu0 %119
    %123 = vset.pattern.permute.xlu0 2
    %124 = vperm.xlu0 %123, %v58
    %v125 = vpop.permute.xlu0 %124
    %128 = vset.pattern.permute.xlu0 2
    %129 = vperm.xlu0 %128, %v59
    %v130 = vpop.permute.xlu0 %129
    %133 = vset.pattern.permute.xlu0 2
    %134 = vperm.xlu0 %133, %v60
    %v135 = vpop.permute.xlu0 %134
    %138 = vset.pattern.permute.xlu0 2
    %139 = vperm.xlu0 %138, %v61
    %v140 = vpop.permute.xlu0 %139
    %v142 = vsub.f32 %v30, %v65
    %v143 = vsub.f32 %v31, %v70
    %v144 = vsub.f32 %v32, %v75
    %v145 = vsub.f32 %v33, %v80
    %v146 = vsub.f32 %v34, %v85
    %v147 = vsub.f32 %v35, %v90
    %v148 = vsub.f32 %v36, %v95
    %v149 = vsub.f32 %v37, %v100
    %v150 = vsub.f32 %v38, %v105
    %v151 = vsub.f32 %v39, %v110
    %v152 = vsub.f32 %v40, %v115
    %v153 = vsub.f32 %v41, %v120
    %v154 = vsub.f32 %v42, %v125
    %v155 = vsub.f32 %v43, %v130
    %v156 = vsub.f32 %v44, %v135
    %v157 = vsub.f32 %v45, %v140
    %158 = vset.pattern.permute.xlu0 1
    %159 = vperm.xlu0 %158, %v46
    %v160 = vpop.permute.xlu0 %159
    %162 = vset.pattern.permute.xlu0 1
    %163 = vperm.xlu0 %162, %v47
    %v164 = vpop.permute.xlu0 %163
    %166 = vset.pattern.permute.xlu0 1
    %167 = vperm.xlu0 %166, %v48
    %v168 = vpop.permute.xlu0 %167
    %170 = vset.pattern.permute.xlu0 1
    %171 = vperm.xlu0 %170, %v49
    %v172 = vpop.permute.xlu0 %171
    %174 = vset.pattern.permute.xlu0 1
    %175 = vperm.xlu0 %174, %v50
    %v176 = vpop.permute.xlu0 %175
    %178 = vset.pattern.permute.xlu0 1
    %179 = vperm.xlu0 %178, %v51
    %v180 = vpop.permute.xlu0 %179
    %182 = vset.pattern.permute.xlu0 1
    %183 = vperm.xlu0 %182, %v52
    %v184 = vpop.permute.xlu0 %183
    %186 = vset.pattern.permute.xlu0 1
    %187 = vperm.xlu0 %186, %v53
    %v188 = vpop.permute.xlu0 %187
    %190 = vset.pattern.permute.xlu0 1
    %191 = vperm.xlu0 %190, %v54
    %v192 = vpop.permute.xlu0 %191
    %194 = vset.pattern.permute.xlu0 1
    %195 = vperm.xlu0 %194, %v55
    %v196 = vpop.permute.xlu0 %195
    %198 = vset.pattern.permute.xlu0 1
    %199 = vperm.xlu0 %198, %v56
    %v200 = vpop.permute.xlu0 %199
    %202 = vset.pattern.permute.xlu0 1
    %203 = vperm.xlu0 %202, %v57
    %v204 = vpop.permute.xlu0 %203
    %206 = vset.pattern.permute.xlu0 1
    %207 = vperm.xlu0 %206, %v58
    %v208 = vpop.permute.xlu0 %207
    %210 = vset.pattern.permute.xlu0 1
    %211 = vperm.xlu0 %210, %v59
    %v212 = vpop.permute.xlu0 %211
    %214 = vset.pattern.permute.xlu0 1
    %215 = vperm.xlu0 %214, %v60
    %v216 = vpop.permute.xlu0 %215
    %218 = vset.pattern.permute.xlu0 1
    %219 = vperm.xlu0 %218, %v61
    %v220 = vpop.permute.xlu0 %219
    %v222 = vmul.f32 %v142, %v160
    %v223 = vmul.f32 %v143, %v164
    %v224 = vmul.f32 %v144, %v168
    %v225 = vmul.f32 %v145, %v172
    %v226 = vmul.f32 %v146, %v176
    %v227 = vmul.f32 %v147, %v180
    %v228 = vmul.f32 %v148, %v184
    %v229 = vmul.f32 %v149, %v188
    %v230 = vmul.f32 %v150, %v192
    %v231 = vmul.f32 %v151, %v196
    %v232 = vmul.f32 %v152, %v200
    %v233 = vmul.f32 %v153, %v204
    %v234 = vmul.f32 %v154, %v208
    %v235 = vmul.f32 %v155, %v212
    %v236 = vmul.f32 %v156, %v216
    %v237 = vmul.f32 %v157, %v220
    %v238 = vround.ne.pseudo %v222
    %v239 = vround.ne.pseudo %v223
    %v240 = vround.ne.pseudo %v224
    %v241 = vround.ne.pseudo %v225
    %v242 = vround.ne.pseudo %v226
    %v243 = vround.ne.pseudo %v227
    %v244 = vround.ne.pseudo %v228
    %v245 = vround.ne.pseudo %v229
    %v246 = vround.ne.pseudo %v230
    %v247 = vround.ne.pseudo %v231
    %v248 = vround.ne.pseudo %v232
    %v249 = vround.ne.pseudo %v233
    %v250 = vround.ne.pseudo %v234
    %v251 = vround.ne.pseudo %v235
    %v252 = vround.ne.pseudo %v236
    %v253 = vround.ne.pseudo %v237
    %v254 = vmax.f32 %v238, 0.0
    %v255 = vmax.f32 %v239, 0.0
    %v256 = vmax.f32 %v240, 0.0
    %v257 = vmax.f32 %v241, 0.0
    %v258 = vmax.f32 %v242, 0.0
    %v259 = vmax.f32 %v243, 0.0
    %v260 = vmax.f32 %v244, 0.0
    %v261 = vmax.f32 %v245, 0.0
    %v262 = vmax.f32 %v246, 0.0
    %v263 = vmax.f32 %v247, 0.0
    %v264 = vmax.f32 %v248, 0.0
    %v265 = vmax.f32 %v249, 0.0
    %v266 = vmax.f32 %v250, 0.0
    %v267 = vmax.f32 %v251, 0.0
    %v268 = vmax.f32 %v252, 0.0
    %v269 = vmax.f32 %v253, 0.0
    %270 = vset.pattern.permute.xlu0 3
    %271 = vperm.xlu0 %270, %v46
    %v272 = vpop.permute.xlu0 %271
    %274 = vset.pattern.permute.xlu0 3
    %275 = vperm.xlu0 %274, %v47
    %v276 = vpop.permute.xlu0 %275
    %278 = vset.pattern.permute.xlu0 3
    %279 = vperm.xlu0 %278, %v48
    %v280 = vpop.permute.xlu0 %279
    %282 = vset.pattern.permute.xlu0 3
    %283 = vperm.xlu0 %282, %v49
    %v284 = vpop.permute.xlu0 %283
    %286 = vset.pattern.permute.xlu0 3
    %287 = vperm.xlu0 %286, %v50
    %v288 = vpop.permute.xlu0 %287
    %290 = vset.pattern.permute.xlu0 3
    %291 = vperm.xlu0 %290, %v51
    %v292 = vpop.permute.xlu0 %291
    %294 = vset.pattern.permute.xlu0 3
    %295 = vperm.xlu0 %294, %v52
    %v296 = vpop.permute.xlu0 %295
    %298 = vset.pattern.permute.xlu0 3
    %299 = vperm.xlu0 %298, %v53
    %v300 = vpop.permute.xlu0 %299
    %302 = vset.pattern.permute.xlu0 3
    %303 = vperm.xlu0 %302, %v54
    %v304 = vpop.permute.xlu0 %303
    %306 = vset.pattern.permute.xlu0 3
    %307 = vperm.xlu0 %306, %v55
    %v308 = vpop.permute.xlu0 %307
    %310 = vset.pattern.permute.xlu0 3
    %311 = vperm.xlu0 %310, %v56
    %v312 = vpop.permute.xlu0 %311
    %314 = vset.pattern.permute.xlu0 3
    %315 = vperm.xlu0 %314, %v57
    %v316 = vpop.permute.xlu0 %315
    %318 = vset.pattern.permute.xlu0 3
    %319 = vperm.xlu0 %318, %v58
    %v320 = vpop.permute.xlu0 %319
    %322 = vset.pattern.permute.xlu0 3
    %323 = vperm.xlu0 %322, %v59
    %v324 = vpop.permute.xlu0 %323
    %326 = vset.pattern.permute.xlu0 3
    %327 = vperm.xlu0 %326, %v60
    %v328 = vpop.permute.xlu0 %327
    %330 = vset.pattern.permute.xlu0 3
    %331 = vperm.xlu0 %330, %v61
    %v332 = vpop.permute.xlu0 %331
    %v334 = vmin.f32 %v272, %v254
    %v335 = vmin.f32 %v276, %v255
    %v336 = vmin.f32 %v280, %v256
    %v337 = vmin.f32 %v284, %v257
    %v338 = vmin.f32 %v288, %v258
    %v339 = vmin.f32 %v292, %v259
    %v340 = vmin.f32 %v296, %v260
    %v341 = vmin.f32 %v300, %v261
    %v342 = vmin.f32 %v304, %v262
    %v343 = vmin.f32 %v308, %v263
    %v344 = vmin.f32 %v312, %v264
    %v345 = vmin.f32 %v316, %v265
    %v346 = vmin.f32 %v320, %v266
    %v347 = vmin.f32 %v324, %v267
    %v348 = vmin.f32 %v328, %v268
    %v349 = vmin.f32 %v332, %v269
    %350 = vset.pattern.permute.xlu0 0
    %351 = vperm.xlu0 %350, %v46
    %v352 = vpop.permute.xlu0 %351
    %354 = vset.pattern.permute.xlu0 0
    %355 = vperm.xlu0 %354, %v47
    %v356 = vpop.permute.xlu0 %355
    %358 = vset.pattern.permute.xlu0 0
    %359 = vperm.xlu0 %358, %v48
    %v360 = vpop.permute.xlu0 %359
    %362 = vset.pattern.permute.xlu0 0
    %363 = vperm.xlu0 %362, %v49
    %v364 = vpop.permute.xlu0 %363
    %366 = vset.pattern.permute.xlu0 0
    %367 = vperm.xlu0 %366, %v50
    %v368 = vpop.permute.xlu0 %367
    %370 = vset.pattern.permute.xlu0 0
    %371 = vperm.xlu0 %370, %v51
    %v372 = vpop.permute.xlu0 %371
    %374 = vset.pattern.permute.xlu0 0
    %375 = vperm.xlu0 %374, %v52
    %v376 = vpop.permute.xlu0 %375
    %378 = vset.pattern.permute.xlu0 0
    %379 = vperm.xlu0 %378, %v53
    %v380 = vpop.permute.xlu0 %379
    %382 = vset.pattern.permute.xlu0 0
    %383 = vperm.xlu0 %382, %v54
    %v384 = vpop.permute.xlu0 %383
    %386 = vset.pattern.permute.xlu0 0
    %387 = vperm.xlu0 %386, %v55
    %v388 = vpop.permute.xlu0 %387
    %390 = vset.pattern.permute.xlu0 0
    %391 = vperm.xlu0 %390, %v56
    %v392 = vpop.permute.xlu0 %391
    %394 = vset.pattern.permute.xlu0 0
    %395 = vperm.xlu0 %394, %v57
    %v396 = vpop.permute.xlu0 %395
    %398 = vset.pattern.permute.xlu0 0
    %399 = vperm.xlu0 %398, %v58
    %v400 = vpop.permute.xlu0 %399
    %402 = vset.pattern.permute.xlu0 0
    %403 = vperm.xlu0 %402, %v59
    %v404 = vpop.permute.xlu0 %403
    %406 = vset.pattern.permute.xlu0 0
    %407 = vperm.xlu0 %406, %v60
    %v408 = vpop.permute.xlu0 %407
    %410 = vset.pattern.permute.xlu0 0
    %411 = vperm.xlu0 %410, %v61
    %v412 = vpop.permute.xlu0 %411
    %v414 = vmul.f32 %v334, %v352
    %v415 = vmul.f32 %v335, %v356
    %v416 = vmul.f32 %v336, %v360
    %v417 = vmul.f32 %v337, %v364
    %v418 = vmul.f32 %v338, %v368
    %v419 = vmul.f32 %v339, %v372
    %v420 = vmul.f32 %v340, %v376
    %v421 = vmul.f32 %v341, %v380
    %v422 = vmul.f32 %v342, %v384
    %v423 = vmul.f32 %v343, %v388
    %v424 = vmul.f32 %v344, %v392
    %v425 = vmul.f32 %v345, %v396
    %v426 = vmul.f32 %v346, %v400
    %v427 = vmul.f32 %v347, %v404
    %v428 = vmul.f32 %v348, %v408
    %v429 = vmul.f32 %v349, %v412
    %v430 = vadd.f32 %v414, %v65
    %v431 = vadd.f32 %v415, %v70
    %v432 = vadd.f32 %v416, %v75
    %v433 = vadd.f32 %v417, %v80
    %v434 = vadd.f32 %v418, %v85
    %v435 = vadd.f32 %v419, %v90
    %v436 = vadd.f32 %v420, %v95
    %v437 = vadd.f32 %v421, %v100
    %v438 = vadd.f32 %v422, %v105
    %v439 = vadd.f32 %v423, %v110
    %v440 = vadd.f32 %v424, %v115
    %v441 = vadd.f32 %v425, %v120
    %v442 = vadd.f32 %v426, %v125
    %v443 = vadd.f32 %v427, %v130
    %v444 = vadd.f32 %v428, %v135
    %v445 = vadd.f32 %v429, %v140
    %v446 = vpack.c.bf16 %v431, %v430
    %v447 = vpack.c.bf16 %v433, %v432
    %v448 = vpack.c.bf16 %v435, %v434
    %v449 = vpack.c.bf16 %v437, %v436
    %v450 = vpack.c.bf16 %v439, %v438
    %v451 = vpack.c.bf16 %v441, %v440
    %v452 = vpack.c.bf16 %v443, %v442
    %v453 = vpack.c.bf16 %v445, %v444
    %v454 = vld [vmem:[#allocation2] sm:$0xf]
    %v455 = vld [vmem:[#allocation2 + $0x4] sm:$0xf]
    %v456 = vld [vmem:[#allocation2 + $0x8] sm:$0xf]
    %v457 = vld [vmem:[#allocation2 + $0xc] sm:$0xf]
    %v458 = vld [vmem:[#allocation2 + $0x10] sm:$0xf]
    %v459 = vld [vmem:[#allocation2 + $0x14] sm:$0xf]
    %v460 = vld [vmem:[#allocation2 + $0x18] sm:$0xf]
    %v461 = vld [vmem:[#allocation2 + $0x1c] sm:$0xf]
    %v462 = vld [vmem:[#allocation2 + $0x20] sm:$0xf]
    %v463 = vld [vmem:[#allocation2 + $0x24] sm:$0xf]
    %v464 = vld [vmem:[#allocation2 + $0x28] sm:$0xf]
    %v465 = vld [vmem:[#allocation2 + $0x2c] sm:$0xf]
    %v466 = vld [vmem:[#allocation2 + $0x30] sm:$0xf]
    %v467 = vld [vmem:[#allocation2 + $0x34] sm:$0xf]
    %v468 = vld [vmem:[#allocation2 + $0x38] sm:$0xf]
    %v469 = vld [vmem:[#allocation2 + $0x3c] sm:$0xf]
    %v486 = vunpack.c.l.b16 %v454
    %v487 = vunpack.c.l.b16 %v455
    %v488 = vunpack.c.l.b16 %v456
    %v489 = vunpack.c.l.b16 %v457
    %v490 = vunpack.c.l.b16 %v458
    %v491 = vunpack.c.l.b16 %v459
    %v492 = vunpack.c.l.b16 %v460
    %v493 = vunpack.c.l.b16 %v461
    %v494 = vunpack.c.l.b16 %v462
    %v495 = vunpack.c.l.b16 %v463
    %v496 = vunpack.c.l.b16 %v464
    %v497 = vunpack.c.l.b16 %v465
    %v498 = vunpack.c.l.b16 %v466
    %v499 = vunpack.c.l.b16 %v467
    %v500 = vunpack.c.l.b16 %v468
    %v501 = vunpack.c.l.b16 %v469
    %v502 = vpack.c.b16 %v487, %v486
    %v503 = vpack.c.b16 %v489, %v488
    %v504 = vpack.c.b16 %v491, %v490
    %v505 = vpack.c.b16 %v493, %v492
    %v506 = vpack.c.b16 %v495, %v494
    %v507 = vpack.c.b16 %v497, %v496
    %v508 = vpack.c.b16 %v499, %v498
    %v509 = vpack.c.b16 %v501, %v500
    %518 = vmatprep.subr.bf16.mxu0 0
    %519 = vmatpush1.bf16.msra.mxu0 %v502
    %520 = vmatprep.subr.bf16.mxu0 0
    %521 = vmatpush1.bf16.msra.mxu0 %v503
    %522 = vmatprep.subr.bf16.mxu0 0
    %523 = vmatpush1.bf16.msra.mxu0 %v504
    %524 = vmatprep.subr.bf16.mxu0 0
    %525 = vmatpush1.bf16.msra.mxu0 %v505
    %526 = vmatprep.subr.bf16.mxu0 0
    %527 = vmatpush1.bf16.msra.mxu0 %v506
    %528 = vmatprep.subr.bf16.mxu0 0
    %529 = vmatpush1.bf16.msra.mxu0 %v507
    %530 = vmatprep.subr.bf16.mxu0 0
    %531 = vmatpush1.bf16.msra.mxu0 %v508
    %532 = vmatprep.subr.bf16.mxu0 0
    %533 = vmatpush1.bf16.msra.mxu0 %v509
    %534 = vmatprep.subr.bf16.mxu0 0
    %535 = vmatpush1.bf16.msra.mxu0 0
    %536 = vmatprep.subr.bf16.mxu0 0
    %537 = vmatpush1.bf16.msra.mxu0 0
    %538 = vmatprep.subr.bf16.mxu0 0
    %539 = vmatpush1.bf16.msra.mxu0 0
    %540 = vmatprep.subr.bf16.mxu0 0
    %541 = vmatpush1.bf16.msra.mxu0 0
    %542 = vmatprep.subr.bf16.mxu0 0
    %543 = vmatpush1.bf16.msra.mxu0 0
    %544 = vmatprep.subr.bf16.mxu0 0
    %545 = vmatpush1.bf16.msra.mxu0 0
    %546 = vmatprep.subr.bf16.mxu0 0
    %547 = vmatpush1.bf16.msra.mxu0 0
    %548 = vmatprep.subr.bf16.mxu0 0
    %549 = vmatpush1.bf16.msra.mxu0 0
    %550 = vmatprep.mubr.bf16.mxu0 0
    %551 = vmatmul.mubr.bf16.gmra.mrb[0].mxu0 %v446
    %v552 = vpop.f32.mrb[0].mxu0
    %v553 = vadd.f32 0.0, %v552
    %v554 = vpop.f32.mrb[0].mxu0
    %v555 = vpop.f32.mrb[0].mxu0
    %v556 = vadd.f32 0.0, %v555
    %v557 = vpop.f32.mrb[0].mxu0
    %558 = vmatprep.mubr.bf16.mxu0 0
    %559 = vmatmul.mubr.bf16.gmra.mrb[0].mxu0 %v447
    %v560 = vpop.f32.mrb[0].mxu0
    %v561 = vadd.f32 0.0, %v560
    %v562 = vpop.f32.mrb[0].mxu0
    %v563 = vpop.f32.mrb[0].mxu0
    %v564 = vadd.f32 0.0, %v563
    %v565 = vpop.f32.mrb[0].mxu0
    %566 = vmatprep.mubr.bf16.mxu0 0
    %567 = vmatmul.mubr.bf16.gmra.mrb[0].mxu0 %v448
    %v568 = vpop.f32.mrb[0].mxu0
    %v569 = vadd.f32 0.0, %v568
    %v570 = vpop.f32.mrb[0].mxu0
    %v571 = vpop.f32.mrb[0].mxu0
    %v572 = vadd.f32 0.0, %v571
    %v573 = vpop.f32.mrb[0].mxu0
    %574 = vmatprep.mubr.bf16.mxu0 0
    %575 = vmatmul.mubr.bf16.gmra.mrb[0].mxu0 %v449
    %v576 = vpop.f32.mrb[0].mxu0
    %v577 = vadd.f32 0.0, %v576
    %v578 = vpop.f32.mrb[0].mxu0
    %v579 = vpop.f32.mrb[0].mxu0
    %v580 = vadd.f32 0.0, %v579
    %v581 = vpop.f32.mrb[0].mxu0
    %582 = vmatprep.mubr.bf16.mxu0 0
    %583 = vmatmul.mubr.bf16.gmra.mrb[0].mxu0 %v450
    %v584 = vpop.f32.mrb[0].mxu0
    %v585 = vadd.f32 0.0, %v584
    %v586 = vpop.f32.mrb[0].mxu0
    %v587 = vpop.f32.mrb[0].mxu0
    %v588 = vadd.f32 0.0, %v587
    %v589 = vpop.f32.mrb[0].mxu0
    %590 = vmatprep.mubr.bf16.mxu0 0
    %591 = vmatmul.mubr.bf16.gmra.mrb[0].mxu0 %v451
    %v592 = vpop.f32.mrb[0].mxu0
    %v593 = vadd.f32 0.0, %v592
    %v594 = vpop.f32.mrb[0].mxu0
    %v595 = vpop.f32.mrb[0].mxu0
    %v596 = vadd.f32 0.0, %v595
    %v597 = vpop.f32.mrb[0].mxu0
    %598 = vmatprep.mubr.bf16.mxu0 0
    %599 = vmatmul.mubr.bf16.gmra.mrb[0].mxu0 %v452
    %v600 = vpop.f32.mrb[0].mxu0
    %v601 = vadd.f32 0.0, %v600
    %v602 = vpop.f32.mrb[0].mxu0
    %v603 = vpop.f32.mrb[0].mxu0
    %v604 = vadd.f32 0.0, %v603
    %v605 = vpop.f32.mrb[0].mxu0
    %606 = vmatprep.mubr.bf16.mxu0 0
    %607 = vmatmul.mubr.bf16.gmra.mrb[0].mxu0 %v453
    %v608 = vpop.f32.mrb[0].mxu0
    %v609 = vadd.f32 0.0, %v608
    %v610 = vpop.f32.mrb[0].mxu0
    %v611 = vpop.f32.mrb[0].mxu0
    %v612 = vadd.f32 0.0, %v611
    %v613 = vpop.f32.mrb[0].mxu0
    %614 = vdwg.mxu0
    %v615 = vpack.c.bf16 %v556, %v553
    %v616 = vpack.c.bf16 %v564, %v561
    %v617 = vpack.c.bf16 %v572, %v569
    %v618 = vpack.c.bf16 %v580, %v577
    %v619 = vpack.c.bf16 %v588, %v585
    %v620 = vpack.c.bf16 %v596, %v593
    %v621 = vpack.c.bf16 %v604, %v601
    %v622 = vpack.c.bf16 %v612, %v609
    %v631 = vunpack.c.l.b16 %v615
    %v632 = vunpack.c.h.b16 %v615
    %v633 = vunpack.c.l.b16 %v616
    %v634 = vunpack.c.h.b16 %v616
    %v635 = vunpack.c.l.b16 %v617
    %v636 = vunpack.c.h.b16 %v617
    %v637 = vunpack.c.l.b16 %v618
    %v638 = vunpack.c.h.b16 %v618
    %v639 = vunpack.c.l.b16 %v619
    %v640 = vunpack.c.h.b16 %v619
    %v641 = vunpack.c.l.b16 %v620
    %v642 = vunpack.c.h.b16 %v620
    %v643 = vunpack.c.l.b16 %v621
    %v644 = vunpack.c.h.b16 %v621
    %v645 = vunpack.c.l.b16 %v622
    %v646 = vunpack.c.h.b16 %v622
    %v647 = vpack.c.b16 %v631, %v631
    %v648 = vpack.c.b16 %v632, %v632
    %v649 = vpack.c.b16 %v633, %v633
    %v650 = vpack.c.b16 %v634, %v634
    %v651 = vpack.c.b16 %v635, %v635
    %v652 = vpack.c.b16 %v636, %v636
    %v653 = vpack.c.b16 %v637, %v637
    %v654 = vpack.c.b16 %v638, %v638
    %v655 = vpack.c.b16 %v639, %v639
    %v656 = vpack.c.b16 %v640, %v640
    %v657 = vpack.c.b16 %v641, %v641
    %v658 = vpack.c.b16 %v642, %v642
    %v659 = vpack.c.b16 %v643, %v643
    %v660 = vpack.c.b16 %v644, %v644
    %v661 = vpack.c.b16 %v645, %v645
    %v662 = vpack.c.b16 %v646, %v646
    %679 = vst [vmem:[#allocation5] sm:$0xf] %v647
    %680 = vst [vmem:[#allocation5 + $0x4] sm:$0xf] %v648
    %681 = vst [vmem:[#allocation5 + $0x8] sm:$0xf] %v649
    %682 = vst [vmem:[#allocation5 + $0xc] sm:$0xf] %v650
    %683 = vst [vmem:[#allocation5 + $0x10] sm:$0xf] %v651
    %684 = vst [vmem:[#allocation5 + $0x14] sm:$0xf] %v652
    %685 = vst [vmem:[#allocation5 + $0x18] sm:$0xf] %v653
    %686 = vst [vmem:[#allocation5 + $0x1c] sm:$0xf] %v654
    %687 = vst [vmem:[#allocation5 + $0x20] sm:$0xf] %v655
    %688 = vst [vmem:[#allocation5 + $0x24] sm:$0xf] %v656
    %689 = vst [vmem:[#allocation5 + $0x28] sm:$0xf] %v657
    %690 = vst [vmem:[#allocation5 + $0x2c] sm:$0xf] %v658
    %691 = vst [vmem:[#allocation5 + $0x30] sm:$0xf] %v659
    %692 = vst [vmem:[#allocation5 + $0x34] sm:$0xf] %v660
    %693 = vst [vmem:[#allocation5 + $0x38] sm:$0xf] %v661
    %694 = vst [vmem:[#allocation5 + $0x3c] sm:$0xf] %v662
    // Predicated region
    $region18: #{tpu_custom_call.1} parent=1 // pred_check
      _
    $region19: #{tpu_custom_call.1} parent=1 // pred_check_branch
      %696 = sbr.rel (0) target = $region21
    $region20: #{tpu_custom_call.1} parent=1 // pred_region
      %s698 = ssub.s32 1024, 1024
      %699 = vsyncadd [#allocation4], %s698
      %s700 = sshll.u32 [#allocation5], 4
      %s701 = int_to_ptr.vmem [resolvable:$true] %s700
      %706 = dma.vmem_to_hbm [thread:$0]  %s701, 1024, %s3, [#allocation4], 64, 64, 4
    $region21: #{tpu_custom_call.1} parent=1 // pred_fallthru
      _
    // Predicated region
    $region22: #{tpu_custom_call.1} parent=1 // pred_check
      _
    $region23: #{tpu_custom_call.1} parent=1 // pred_check_branch
      %708 = sbr.rel (0) target = $region25
    $region24: #{tpu_custom_call.1} parent=1 // pred_region
      %709 = dma.done [#allocation4], 1024
    $region25: #{tpu_custom_call.1} parent=1 // pred_fallthru
      _
    %710 = vsyncpa [#allocation3], 1
    %711 = vsyncpa [#allocation4], 1

</llo_original>
